<compile_context>
chip_gen: v6e
topology: v6e:2x2x1
jax: 0.10.0
libtpu: 0.0.40
codegen_flags: <defaults>
</compile_context>

<pallas_src>
import functools

import jax
import jax.numpy as jnp
import numpy as np
from jax.experimental import pallas as pl
from jax.experimental.pallas import tpu as pltpu


def _round_up(x, m):
    return ((x + m - 1) // m) * m


def _length_regulator_kernel(woff_ref, total_ref, x_ref, bounds_ref, o_ref, acc_ref,
                             *, pad_value, matmul_dtype):
    # woff_ref:   (B * n_t,) SMEM   window slab offsets (used only by index_maps)
    # total_ref:  (B,)       SMEM   per-batch total output frames
    # x_ref:      (1, slab, D_p)    source-token window slab of this batch element
    # bounds_ref: (1, 2, slab)      row 0 = starts, row 1 = ends for the same slab
    # o_ref:      (1, tile_t, D_p)  output frames [t0, t0 + tile_t)
    # acc_ref:    (tile_t, D_p) f32 accumulator across the window axis
    del woff_ref
    tile_t = o_ref.shape[1]
    slab = x_ref.shape[1]
    d_p = o_ref.shape[2]

    b = pl.program_id(0)
    t = pl.program_id(1)
    w = pl.program_id(2)
    last_w = w == pl.num_programs(2) - 1

    t0 = t * tile_t
    n_valid = total_ref[b] - t0          # frames of this tile carrying real data
    has_data = n_valid > 0               # False -> pure padding tile

    @pl.when(has_data)
    def _accumulate():
        @pl.when(w == 0)
        def _init():
            acc_ref[...] = jnp.zeros_like(acc_ref)

        bounds = bounds_ref[0]                        # (2, slab) int32
        s_rel = bounds[0:1, :] - t0                   # shift bounds, not the iota
        e_rel = bounds[1:2, :] - t0
        t_ids = jax.lax.broadcasted_iota(jnp.int32, (tile_t, slab), 0)
        # frame t selects token i of this slab iff starts[i] <= t0+t < ends[i]
        sel = jnp.logical_and(t_ids >= s_rel, t_ids < e_rel)
        acc_ref[...] += jnp.dot(sel.astype(matmul_dtype),
                                x_ref[0].astype(matmul_dtype),
                                preferred_element_type=jnp.float32)

    @pl.when(last_w)
    def _finalize():
        @pl.when(has_data)
        def _store_frames():
            out = acc_ref[...]
            if pad_value == 0.0:
                # all-zero sel rows already yield exact zeros -> no mask pass
                o_ref[0] = out.astype(o_ref.dtype)
            else:
                @pl.when(n_valid >= tile_t)
                def _interior():
                    o_ref[0] = out.astype(o_ref.dtype)

                @pl.when(n_valid < tile_t)
                def _boundary():
                    rows = jax.lax.broadcasted_iota(jnp.int32, (tile_t, 1), 0)
                    o_ref[0] = jnp.where(rows < n_valid, out,
                                         jnp.float32(pad_value)).astype(o_ref.dtype)

        @pl.when(jnp.logical_not(has_data))
        def _store_pad():
            o_ref[0] = jnp.full((tile_t, d_p), pad_value, dtype=o_ref.dtype)


def length_regulator(xs, ds, alpha=1.0, pad_value=0.0, *, tile_t=512, out_length=None,
                     vmem_budget_bytes=40 * 1024 * 1024):
    """JAX/Pallas equivalent of espnet LengthRegulator.forward.

    The output length is data dependent, so `ds` must be concrete (eager call).
    Passing an `out_length` that is a multiple of the time tile (and D % 128 == 0)
    lets the wrapper skip the post-kernel slice entirely.
    """
    xs = jnp.asarray(xs)
    ds_np = np.asarray(ds).astype(np.int64)

    if alpha != 1.0:
        assert alpha > 0
        ds_np = np.round(ds_np.astype(np.float64) * alpha).astype(np.int64)

    # PyTorch fallback: fires only when the global sum is zero -> every row total
    # is zero and every duration becomes 1.  Keep the per-row mask for fidelity.
    if ds_np.sum() == 0:
        ds_np[ds_np.sum(axis=1) == 0] = 1

    B, Tmax, D = xs.shape
    xdtype = xs.dtype
    itemsize = xs.dtype.itemsize

    # ---- resolve output length on the host (no device readback) -------------
    true_T_out = int(ds_np.sum(axis=1).max())
    if out_length is None:
        T_out = max(true_T_out, 1)
    else:
        out_length = int(out_length)
        assert out_length >= true_T_out, (
            f"out_length={out_length} < required {true_T_out}")
        T_out = max(out_length, 1)

    # ---- hardware alignment --------------------------------------------------
    t_align = 16 if xdtype == jnp.bfloat16 else 8
    Tmax_p = _round_up(Tmax, 128)
    D_p = _round_up(D, 128)
    slab = 256 if Tmax_p % 256 == 0 else 128     # deeper contraction for v6e/v7x MXU
    n_slabs = Tmax_p // slab

    # ---- output-time tile sizing under an explicit (v7x-safe) VMEM budget ----
    tile_t_eff = int(min(max(int(tile_t), t_align), _round_up(T_out, t_align)))
    tile_t_eff = _round_up(tile_t_eff, t_align)

    def _vmem_need(rows):
        return (2 * slab * D_p * itemsize          # x window slab, double buffered
                + 2 * 2 * slab * 4                 # bounds slab, double buffered
                + 2 * rows * D_p * itemsize        # output tile, double buffered
                + rows * D_p * 4                   # f32 accumulator scratch
                + rows * slab * (4 + itemsize))    # sel / cast temporaries (approx)

    while _vmem_need(tile_t_eff) > vmem_budget_bytes and tile_t_eff > t_align:
        tile_t_eff = max(t_align, _round_up(tile_t_eff // 2, t_align))

    T_pad = _round_up(T_out, tile_t_eff)
    n_t = T_pad // tile_t_eff

    # ---- pad x (device) only when shapes are not already aligned -------------
    xs_p = xs
    if Tmax_p != Tmax or D_p != D:
        xs_p = jnp.pad(xs, ((0, 0), (0, Tmax_p - Tmax), (0, D_p - D)))

    # ---- duration cumsums -> per-token [start, end); padded tokens never hit --
    ds_pad = np.zeros((B, Tmax_p), dtype=np.int64)
    ds_pad[:, :Tmax] = ds_np
    ends_np = np.cumsum(ds_pad, axis=1)
    starts_np = ends_np - ds_pad
    bounds = jnp.asarray(
        np.stack([starts_np, ends_np], axis=1).astype(np.int32))   # (B, 2, Tmax_p)

    # ---- host-side window planning (scalar-prefetched slab offsets) ----------
    totals_np = ends_np[:, -1]                                      # (B,)
    t0s = np.arange(n_t, dtype=np.int64) * tile_t_eff               # (n_t,)
    safe_last = np.maximum(totals_np, 1)[:, None] - 1               # clamp pad tiles
    f_first = np.minimum(t0s[None, :], safe_last)                   # (B, n_t)
    f_last = np.minimum(t0s[None, :] + tile_t_eff - 1, safe_last)
    lo_tok = np.empty((B, n_t), dtype=np.int64)
    hi_tok = np.empty((B, n_t), dtype=np.int64)
    for bb in range(B):
        lo_tok[bb] = np.searchsorted(ends_np[bb], f_first[bb], side="right")
        hi_tok[bb] = np.searchsorted(ends_np[bb], f_last[bb], side="right")
    lo_tok = np.minimum(lo_tok, Tmax_p - 1)
    hi_tok = np.minimum(hi_tok, Tmax_p - 1)
    slab_lo = lo_tok // slab
    slab_hi = hi_tok // slab
    n_win = int(min(n_slabs, max(1, int((slab_hi - slab_lo + 1).max()))))
    woff_np = np.minimum(slab_lo, n_slabs - n_win).astype(np.int32).reshape(-1)
    woff = jnp.asarray(woff_np)                                     # (B * n_t,)
    totals = jnp.asarray(totals_np.astype(np.int32))                # (B,)

    # bf16 one-hot matmul is bit-exact for bf16 inputs (sel is exactly 0/1).
    matmul_dtype = jnp.bfloat16 if xdtype == jnp.bfloat16 else jnp.float32
    kernel = functools.partial(_length_regulator_kernel,
                               pad_value=float(pad_value),
                               matmul_dtype=matmul_dtype)

    vmem_limit = int(max(32 * 1024 * 1024,
                         min(_vmem_need(tile_t_eff) + (8 << 20), 56 * 1024 * 1024)))

    grid = (B, n_t, n_win)
    out = pl.pallas_call(
        kernel,
        out_shape=jax.ShapeDtypeStruct((B, T_pad, D_p), xdtype),
        grid_spec=pltpu.PrefetchScalarGridSpec(
            num_scalar_prefetch=2,
            grid=grid,
            in_specs=[
                pl.BlockSpec(
                    (1, slab, D_p),
                    lambda b, t, w, woff_r, tot_r: (b, woff_r[b * n_t + t] + w, 0)),
                pl.BlockSpec(
                    (1, 2, slab),
                    lambda b, t, w, woff_r, tot_r: (b, 0, woff_r[b * n_t + t] + w)),
            ],
            out_specs=pl.BlockSpec(
                (1, tile_t_eff, D_p),
                lambda b, t, w, woff_r, tot_r: (b, t, 0)),
            scratch_shapes=[pltpu.VMEM((tile_t_eff, D_p), jnp.float32)],
        ),
        compiler_params=pltpu.CompilerParams(
            dimension_semantics=("parallel", "parallel", "arbitrary"),
            vmem_limit_bytes=vmem_limit,
        ),
    )(woff, totals, xs_p, bounds)

    if T_pad == T_out and D_p == D:
        return out                       # no extra HBM slice pass
    return out[:, :T_out, :D]


def _reference(xs, ds, alpha=1.0, pad_value=0.0):
    """Pure numpy reference (repeat_interleave + pad_list)."""
    xs = np.asarray(xs)
    ds = np.asarray(ds).astype(np.int64)
    if alpha != 1.0:
        ds = np.round(ds.astype(np.float64) * alpha).astype(np.int64)
    if ds.sum() == 0:
        ds[ds.sum(axis=1) == 0] = 1
    reps = [np.repeat(x, d, axis=0) for x, d in zip(xs, ds)]
    T_out = max(r.shape[0] for r in reps)
    out = np.full((xs.shape[0], T_out, xs.shape[2]), pad_value, dtype=xs.dtype)
    for b, r in enumerate(reps):
        out[b, : r.shape[0]] = r
    return out


if __name__ == "__main__":
    key = jax.random.PRNGKey(0)
    kx, kd = jax.random.split(key)

    B, Tmax, D = 2, 8, 32
    xs = jax.random.normal(kx, (B, Tmax, D), dtype=jnp.float32)
    ds = jax.random.randint(kd, (B, Tmax), minval=0, maxval=4, dtype=jnp.int32)

    # Case 1: default alpha / zero padding (pad-mask pass skipped).
    out = jax.block_until_ready(length_regulator(xs, ds, alpha=1.0, pad_value=0.0))
    ref = _reference(np.asarray(xs), np.asarray(ds), alpha=1.0, pad_value=0.0)
    assert out.shape == ref.shape, (out.shape, ref.shape)
    np.testing.assert_allclose(np.asarray(out), ref, rtol=1e-6, atol=1e-6)

    # Case 2: speed-controlled durations and nonzero pad value (boundary mask).
    out2 = jax.block_until_ready(length_regulator(xs, ds, alpha=1.3, pad_value=-1.0))
    ref2 = _reference(np.asarray(xs), np.asarray(ds), alpha=1.3, pad_value=-1.0)
    assert out2.shape == ref2.shape, (out2.shape, ref2.shape)
    np.testing.assert_allclose(np.asarray(out2), ref2, rtol=1e-6, atol=1e-6)

    # Case 3: bf16, multi-tile ragged batch with an all-zero-duration row;
    # exercises the window (n_win > 1), pad-tile gating and boundary masking.
    k1, k2 = jax.random.split(jax.random.PRNGKey(1))
    B3, T3, D3 = 3, 300, 64
    xs3 = jax.random.normal(k1, (B3, T3, D3), dtype=jnp.bfloat16)
    ds3 = np.asarray(jax.random.randint(k2, (B3, T3), minval=0, maxval=6,
                                        dtype=jnp.int32)).astype(np.int64)
    ds3[2] = 0                       # fully padded sample (global sum still > 0)
    out3 = jax.block_until_ready(
        length_regulator(xs3, ds3, alpha=1.0, pad_value=0.5, tile_t=64))
    ref3 = _reference(np.asarray(xs3).astype(np.float32), ds3,
                      alpha=1.0, pad_value=0.5)
    assert out3.shape == ref3.shape, (out3.shape, ref3.shape)
    np.testing.assert_allclose(np.asarray(out3).astype(np.float32), ref3,
                               rtol=1e-6, atol=1e-6)

    print("KERNEL_OK")
</pallas_src>

<mosaic_0001>
module attributes {stable_mosaic.version = 11 : i64} {
  func.func @_length_regulator_kernel(%arg0: i32, %arg1: i32, %arg2: i32, %arg3: memref<2xi32, #tpu.memory_space<smem>>, %arg4: memref<2xi32, #tpu.memory_space<smem>>, %arg5: memref<1x128x128xf32, #tpu.memory_space<vmem>>, %arg6: memref<1x2x128xi32, #tpu.memory_space<vmem>>, %arg7: memref<1x16x128xf32, #tpu.memory_space<vmem>>, %arg8: memref<16x128xf32, #tpu.memory_space<vmem>>) attributes {dimension_semantics = [#tpu.dimension_semantics<parallel>, #tpu.dimension_semantics<parallel>, #tpu.dimension_semantics<arbitrary>], iteration_bounds = array<i64: 2, 1, 1>, scalar_prefetch = 2 : i64, scratch_operands = 1 : i64, tpu.core_type = #tpu.core_type<tc>, window_params = [{transform_indices = @transform_0, window_bounds = array<i64: 1, 128, 128>}, {transform_indices = @transform_1, window_bounds = array<i64: 1, 2, 128>}, {transform_indices = @transform_2, window_bounds = array<i64: 1, 16, 128>}]} {
    %c0_i32 = arith.constant 0 : i32
    %0 = arith.cmpi eq, %arg2, %c0_i32 : i32
    %c16_i32 = arith.constant 16 : i32
    %1 = arith.muli %arg1, %c16_i32 : i32
    %2 = arith.index_cast %arg0 : i32 to index
    %3 = memref.load %arg4[%2] : memref<2xi32, #tpu.memory_space<smem>>
    %4 = arith.subi %3, %1 : i32
    %c0_i32_0 = arith.constant 0 : i32
    %5 = arith.cmpi sgt, %4, %c0_i32_0 : i32
    %6 = arith.extui %5 : i1 to i32
    %c0_i32_1 = arith.constant 0 : i32
    %7 = arith.cmpi ne, %6, %c0_i32_1 : i32
    scf.if %7 {
      %c0_i32_3 = arith.constant 0 : i32
      %10 = arith.cmpi eq, %arg2, %c0_i32_3 : i32
      %11 = arith.extui %10 : i1 to i32
      %c0_i32_4 = arith.constant 0 : i32
      %12 = arith.cmpi ne, %11, %c0_i32_4 : i32
      scf.if %12 {
        %cst_14 = arith.constant 0.000000e+00 : f32
        %35 = vector.broadcast %cst_14 : f32 to vector<16x128xf32>
        %c0_15 = arith.constant 0 : index
        %c0_16 = arith.constant 0 : index
        %36 = vector.load %arg8[%c0_15, %c0_16] : memref<16x128xf32, #tpu.memory_space<vmem>>, vector<16x128xf32>
        tpu.vector_store %arg8[%c0_15, %c0_16], %35 {strides = array<i32>} : memref<16x128xf32, #tpu.memory_space<vmem>>, vector<16x128xf32>,
      } else {
      }
      %c0 = arith.constant 0 : index
      %c0_5 = arith.constant 0 : index
      %c0_6 = arith.constant 0 : index
      %13 = vector.load %arg6[%c0, %c0_5, %c0_6] : memref<1x2x128xi32, #tpu.memory_space<vmem>>, vector<1x2x128xi32>
      %14 = vector.shape_cast %13 : vector<1x2x128xi32> to vector<2x128xi32>
      %15 = vector.extract_strided_slice %14 {offsets = [0, 0], sizes = [1, 128], strides = [1, 1]} : vector<2x128xi32> to vector<1x128xi32>
      %16 = vector.broadcast %1 : i32 to vector<1x128xi32>
      %17 = arith.subi %15, %16 : vector<1x128xi32>
      %18 = vector.extract_strided_slice %14 {offsets = [1, 0], sizes = [1, 128], strides = [1, 1]} : vector<2x128xi32> to vector<1x128xi32>
      %19 = vector.broadcast %1 : i32 to vector<1x128xi32>
      %20 = arith.subi %18, %19 : vector<1x128xi32>
      %21 = tpu.iota {dimensions = array<i32: 0>} : vector<16x128xi32>
      %22 = vector.broadcast %17 : vector<1x128xi32> to vector<16x128xi32>
      %23 = arith.cmpi sge, %21, %22 : vector<16x128xi32>
      %24 = vector.broadcast %20 : vector<1x128xi32> to vector<16x128xi32>
      %25 = arith.cmpi slt, %21, %24 : vector<16x128xi32>
      %26 = arith.andi %23, %25 : vector<16x128xi1>
      %c0_7 = arith.constant 0 : index
      %c0_8 = arith.constant 0 : index
      %27 = vector.load %arg8[%c0_7, %c0_8] : memref<16x128xf32, #tpu.memory_space<vmem>>, vector<16x128xf32>
      %28 = arith.extui %26 : vector<16x128xi1> to vector<16x128xi32>
      %29 = arith.sitofp %28 : vector<16x128xi32> to vector<16x128xf32>
      %c0_9 = arith.constant 0 : index
      %c0_10 = arith.constant 0 : index
      %c0_11 = arith.constant 0 : index
      %30 = vector.load %arg5[%c0_9, %c0_10, %c0_11] : memref<1x128x128xf32, #tpu.memory_space<vmem>>, vector<1x128x128xf32>
      %31 = vector.shape_cast %30 : vector<1x128x128xf32> to vector<128x128xf32>
      %cst = arith.constant dense<0.000000e+00> : vector<16x128xf32>
      %32 = tpu.matmul %29, %31, %cst {dimension_numbers = #tpu.dot_dimension_numbers<[1], [0], [0], [1], [0, 0, 1, 1], [], []>} : vector<16x128xf32>, vector<128x128xf32>, vector<16x128xf32> -> vector<16x128xf32>
      %33 = arith.addf %27, %32 : vector<16x128xf32>
      %c0_12 = arith.constant 0 : index
      %c0_13 = arith.constant 0 : index
      %34 = vector.load %arg8[%c0_12, %c0_13] : memref<16x128xf32, #tpu.memory_space<vmem>>, vector<16x128xf32>
      tpu.vector_store %arg8[%c0_12, %c0_13], %33 {strides = array<i32>} : memref<16x128xf32, #tpu.memory_space<vmem>>, vector<16x128xf32>,
    } else {
    }
    %8 = arith.extui %0 : i1 to i32
    %c0_i32_2 = arith.constant 0 : i32
    %9 = arith.cmpi ne, %8, %c0_i32_2 : i32
    scf.if %9 {
      %10 = arith.extui %5 : i1 to i32
      %c0_i32_3 = arith.constant 0 : i32
      %11 = arith.cmpi ne, %10, %c0_i32_3 : i32
      scf.if %11 {
        %c0 = arith.constant 0 : index
        %c0_5 = arith.constant 0 : index
        %15 = vector.load %arg8[%c0, %c0_5] : memref<16x128xf32, #tpu.memory_space<vmem>>, vector<16x128xf32>
        %c0_6 = arith.constant 0 : index
        %c0_7 = arith.constant 0 : index
        %c0_8 = arith.constant 0 : index
        %16 = vector.load %arg7[%c0_6, %c0_7, %c0_8] : memref<1x16x128xf32, #tpu.memory_space<vmem>>, vector<1x16x128xf32>
        %17 = vector.shape_cast %16 : vector<1x16x128xf32> to vector<16x128xf32>
        %18 = vector.shape_cast %15 : vector<16x128xf32> to vector<1x16x128xf32>
        tpu.vector_store %arg7[%c0_6, %c0_7, %c0_8], %18 {strides = array<i32>} : memref<1x16x128xf32, #tpu.memory_space<vmem>>, vector<1x16x128xf32>,
      } else {
      }
      %true = arith.constant true
      %12 = arith.xori %5, %true : i1
      %13 = arith.extui %12 : i1 to i32
      %c0_i32_4 = arith.constant 0 : i32
      %14 = arith.cmpi ne, %13, %c0_i32_4 : i32
      scf.if %14 {
        %cst = arith.constant 0.000000e+00 : f32
        %15 = vector.broadcast %cst : f32 to vector<16x128xf32>
        %c0 = arith.constant 0 : index
        %c0_5 = arith.constant 0 : index
        %c0_6 = arith.constant 0 : index
        %16 = vector.load %arg7[%c0, %c0_5, %c0_6] : memref<1x16x128xf32, #tpu.memory_space<vmem>>, vector<1x16x128xf32>
        %17 = vector.shape_cast %16 : vector<1x16x128xf32> to vector<16x128xf32>
        %18 = vector.shape_cast %15 : vector<16x128xf32> to vector<1x16x128xf32>
        tpu.vector_store %arg7[%c0, %c0_5, %c0_6], %18 {strides = array<i32>} : memref<1x16x128xf32, #tpu.memory_space<vmem>>, vector<1x16x128xf32>,
      } else {
      }
    } else {
    }
    return
  }
  func.func @transform_0(%arg0: i32, %arg1: i32, %arg2: i32, %arg3: memref<2xi32, #tpu.memory_space<smem>>, %arg4: memref<2xi32, #tpu.memory_space<smem>>) -> (i32, i32, i32) {
    %c1_i32 = arith.constant 1 : i32
    %0 = arith.muli %arg0, %c1_i32 : i32
    %1 = arith.addi %0, %arg1 : i32
    %2 = arith.index_cast %1 : i32 to index
    %3 = memref.load %arg3[%2] : memref<2xi32, #tpu.memory_space<smem>>
    %4 = arith.addi %3, %arg2 : i32
    %c0_i32 = arith.constant 0 : i32
    %c0_i32_0 = arith.constant 0 : i32
    return %arg0, %4, %c0_i32 : i32, i32, i32
  }
  func.func @transform_1(%arg0: i32, %arg1: i32, %arg2: i32, %arg3: memref<2xi32, #tpu.memory_space<smem>>, %arg4: memref<2xi32, #tpu.memory_space<smem>>) -> (i32, i32, i32) {
    %c1_i32 = arith.constant 1 : i32
    %0 = arith.muli %arg0, %c1_i32 : i32
    %1 = arith.addi %0, %arg1 : i32
    %2 = arith.index_cast %1 : i32 to index
    %3 = memref.load %arg3[%2] : memref<2xi32, #tpu.memory_space<smem>>
    %4 = arith.addi %3, %arg2 : i32
    %c0_i32 = arith.constant 0 : i32
    %c0_i32_0 = arith.constant 0 : i32
    return %arg0, %c0_i32, %4 : i32, i32, i32
  }
  func.func @transform_2(%arg0: i32, %arg1: i32, %arg2: i32, %arg3: memref<2xi32, #tpu.memory_space<smem>>, %arg4: memref<2xi32, #tpu.memory_space<smem>>) -> (i32, i32, i32) {
    %c0_i32 = arith.constant 0 : i32
    %c0_i32_0 = arith.constant 0 : i32
    return %arg0, %arg1, %c0_i32 : i32, i32, i32
  }
}

</mosaic_0001>

<llo_original>
// kernel: tpu_custom_call.1
$region0: #{tpu_custom_call.1}
  #allocation0 [shape = 'u32[]', space=smem, size = 0x4, offset = 0x4, fixed_abs, tag = 'smem constant byte address 0x4 - core index']
  #allocation1 [shape = 'u32[144,128]{1,0:T(1,128)}', space=vmem, size = 0x12000, scoped, tag = 'internal scratch']
  #allocation2 [shape = 'f32[16,128]{1,0:T(8,128)}', space=vmem, size = 0x2000, scoped, tag = 'scratch operand']
  #allocation3 [shape = 's32[1]{0}', space=sflag, size = 0x4, scoped, tag = 'scoped memory for tpu_custom_call.1']
  #allocation4 [shape = 'u8[512]{0}', space=smem, size = 0x200, scoped, tag = 'prefetched SMEM operand 0']
  #allocation5 [shape = 'u8[512]{0}', space=smem, size = 0x200, scoped, tag = 'prefetched SMEM operand 1']
  %s0 = inlined_call_operand.hbm [shape: s32[2], index: 0, kind: input, shape index: {}]
  %s1 = inlined_call_operand.vmem [shape: s32[2], index: 1, kind: input, shape index: {}]
  %s2 = inlined_call_operand.hbm [shape: f32[2,128,128], index: 2, kind: input, shape index: {}]
  %s3 = inlined_call_operand.vmem [shape: s32[2,2,128], index: 3, kind: input, shape index: {}]
  %s4 = inlined_call_operand.hbm [shape: f32[2,16,128], index: 4, kind: output, shape index: {}]
  %s5 = sld [smem:[#allocation0]]
  $region65: #{tpu_custom_call.1} parent=0
    _
  %s7 = ssub.s32 1, %s5
  %s8 = scalar_select 0, %s7, %s5
  %10 = dma.hbm_to_smem %s0, 16, [#allocation4], [#allocation3]
  %s11 = sshll.u32 %s1, 4
  %s12 = int_to_ptr.vmem [resolvable:$true] %s11
  %14 = dma.vmem_to_smem %s12, 16, [#allocation5], [#allocation3]
  %15 = dma.done [#allocation3], 32
  %16 = sfence
  $region1: #{tpu_custom_call.1} parent=0
    #allocation6 [shape = 'u8[131072]{0}', space=vmem, size = 0x20000, scoped, tag = 'input window, operand 2']
    #allocation7 [shape = 's32[2]{0}', space=sflag, size = 0x8, scoped, tag = 'scoped memory for tpu_custom_call.1']
    #allocation8 [shape = 's32[2]{0}', space=sflag, size = 0x8, scoped, tag = 'scoped memory for tpu_custom_call.1']
    #allocation9 [shape = 'u8[16384]{0}', space=vmem, size = 0x4000, scoped, tag = 'output window, operand 0']
    %17 = vsyncpa [#allocation7], 0
    %s18 = scalar_lea.sflag [#allocation7], 1
    %19 = vsyncpa %s18, 0
    %20 = vsyncpa [#allocation8], 0
    %s21 = scalar_lea.sflag [#allocation8], 1
    %22 = vsyncpa %s21, 0
    loop: start=0, step=1, limit=4
    $region2: #{tpu_custom_call.1} parent=1 // loop_pre_header
      _
    $region3: #{tpu_custom_call.1} parent=1 // loop_header
      %s24 = sphi 0, %s28
      %p25 = scmp.ge.s32.totalorder %s24, 4
      %s31 = sphi 0, %s50
      %s32 = sphi 0, %s46
      %s33 = sphi 0, %s42
      %s34 = sphi 0, %s31
      %s35 = sphi 0, %s32
      %s36 = sphi 0, %s33
      %s37 = sphi 0, %s34
      %s38 = sphi 0, %s35
      %s39 = sphi 0, %s36
      %s61 = sphi 0, %s63
      %s64 = sphi 0, %s61
      %s65 = sphi 0, %s64
      %s81 = sphi 0, %s65
      %s95 = sphi 0, %s97
      %s98 = sphi 0, %s95
      %s99 = sphi 0, %s98
      %s115 = sphi 0, %s99
      %s123 = sphi 0, %s125
      %s126 = sphi 0, %s123
      %s127 = sphi 0, %s126
      %s143 = sphi 0, %s127
    $region4: #{tpu_custom_call.1} parent=1 // loop_header_branch
      %27 = sbr.rel (%p25) target = $region8
    $region5: #{tpu_custom_call.1} parent=1 // loop_body
      %s29 = ssub.s32 %s24, 1
      %s30 = ssub.s32 %s24, 2
      %s40 = sadd.s32 1, %s33
      %p41 = scmp.ge.s32.totalorder %s40, 1
      %s42 = scalar_select %p41, 0, %s40
      %s43 = sadd.s32 1, %s32
      %s44 = scalar_select %p41, %s43, %s32
      %p45 = scmp.ge.s32.totalorder %s44, 1
      %s46 = scalar_select %p45, 0, %s44
      %s47 = sadd.s32 1, %s31
      %s48 = scalar_select %p45, %s47, %s31
      %p49 = scmp.ge.s32.totalorder %s48, 2
      %s50 = scalar_select %p49, 0, %s48
      %s51 = sadd.s32 %s31, %s32
      %s52 = sld [smem:[#allocation4 + %s51]]
      %s53 = sadd.s32 %s52, %s33
      %s54 = sadd.s32 %s50, %s46
      %s55 = sld [smem:[#allocation4 + %s54]]
      %s56 = sadd.s32 %s55, %s42
      %s57 = ssub.s32 %s31, %s50
      %s58 = ssub.s32 %s53, %s56
      %s59 = sor.u32 %s57, %s58
      %p60 = scmp.eq.s32.totalorder %s59, 0
      %s62 = sadd.s32 %s61, 1
      %s63 = scalar_select %p60, %s61, %s62
      %p66 = pneg %p60
      %p67 = scmp.eq.s32.totalorder %s24, 1
      %p68 = por %p66, %p67
      %p69 = scmp.ne.s32.totalorder %s61, %s64
      %p70 = scmp.eq.s32.totalorder %s24, 0
      %p71 = por %p69, %p70
      %p72 = scmp.ne.s32.totalorder %s61, %s64
      %p73 = scmp.eq.s32.totalorder %s29, 1
      %p74 = por %p72, %p73
      %p75 = scmp.ne.s32.totalorder %s64, %s65
      %p76 = scmp.eq.s32.totalorder %s29, 0
      %p77 = por %p75, %p76
      %p78 = scmp.ne.s32.totalorder %s64, %s65
      %p79 = scmp.eq.s32.totalorder %s30, 1
      %p80 = por %p78, %p79
      %p82 = scmp.ne.s32.totalorder %s65, %s81
      %p83 = scmp.eq.s32.totalorder %s30, 0
      %p84 = por %p82, %p83
      %s85 = sadd.s32 %s31, %s32
      %s86 = sld [smem:[#allocation4 + %s85]]
      %s87 = sadd.s32 %s86, %s33
      %s88 = sadd.s32 %s50, %s46
      %s89 = sld [smem:[#allocation4 + %s88]]
      %s90 = sadd.s32 %s89, %s42
      %s91 = ssub.s32 %s31, %s50
      %s92 = ssub.s32 %s87, %s90
      %s93 = sor.u32 %s91, %s92
      %p94 = scmp.eq.s32.totalorder %s93, 0
      %s96 = sadd.s32 %s95, 1
      %s97 = scalar_select %p94, %s95, %s96
      %p100 = pneg %p94
      %p101 = scmp.eq.s32.totalorder %s24, 1
      %p102 = por %p100, %p101
      %p103 = scmp.ne.s32.totalorder %s95, %s98
      %p104 = scmp.eq.s32.totalorder %s24, 0
      %p105 = por %p103, %p104
      %p106 = scmp.ne.s32.totalorder %s95, %s98
      %p107 = scmp.eq.s32.totalorder %s29, 1
      %p108 = por %p106, %p107
      %p109 = scmp.ne.s32.totalorder %s98, %s99
      %p110 = scmp.eq.s32.totalorder %s29, 0
      %p111 = por %p109, %p110
      %p112 = scmp.ne.s32.totalorder %s98, %s99
      %p113 = scmp.eq.s32.totalorder %s30, 1
      %p114 = por %p112, %p113
      %p116 = scmp.ne.s32.totalorder %s99, %s115
      %p117 = scmp.eq.s32.totalorder %s30, 0
      %p118 = por %p116, %p117
      %s119 = ssub.s32 %s31, %s50
      %s120 = ssub.s32 %s32, %s46
      %s121 = sor.u32 %s119, %s120
      %p122 = scmp.eq.s32.totalorder %s121, 0
      %s124 = sadd.s32 %s123, 1
      %s125 = scalar_select %p122, %s123, %s124
      %p128 = pneg %p122
      %p129 = scmp.eq.s32.totalorder %s24, 1
      %p130 = por %p128, %p129
      %p131 = scmp.ne.s32.totalorder %s123, %s126
      %p132 = scmp.eq.s32.totalorder %s24, 0
      %p133 = por %p131, %p132
      %p134 = scmp.ne.s32.totalorder %s123, %s126
      %p135 = scmp.eq.s32.totalorder %s29, 1
      %p136 = por %p134, %p135
      %p137 = scmp.ne.s32.totalorder %s126, %s127
      %p138 = scmp.eq.s32.totalorder %s29, 0
      %p139 = por %p137, %p138
      %p140 = scmp.ne.s32.totalorder %s126, %s127
      %p141 = scmp.eq.s32.totalorder %s30, 1
      %p142 = por %p140, %p141
      %p144 = scmp.ne.s32.totalorder %s127, %s143
      %p145 = scmp.eq.s32.totalorder %s30, 0
      %p146 = por %p144, %p145
      %p147 = scmp.le.s32.totalorder 1, %s24
      %p148 = scmp.lt.s32.totalorder %s24, 3
      %p149 = pnand %p147, %p148
      %p150 = pneg %p149
      // Predicated region
      $region9: #{tpu_custom_call.1} parent=5 // pred_check
        _
      $region10: #{tpu_custom_call.1} parent=5 // pred_check_branch
        %152 = sbr.rel (%p149) target = $region12
      $region11: #{tpu_custom_call.1} parent=5 // pred_region
        %s153 = ssub.s32 %s24, 1
      $region12: #{tpu_custom_call.1} parent=5 // pred_fallthru
        _
      %p154 = scmp.lt.s32.totalorder %s24, 2
      // Predicated region
      $region13: #{tpu_custom_call.1} parent=5 // pred_check
        %p155 = pneg %p154
      $region14: #{tpu_custom_call.1} parent=5 // pred_check_branch
        %157 = sbr.rel (%p155) target = $region16
      $region15: #{tpu_custom_call.1} parent=5 // pred_region
        // Predicated region
        $region17: #{tpu_custom_call.1} parent=15 // pred_check
          %p158 = pneg %p71
        $region18: #{tpu_custom_call.1} parent=15 // pred_check_branch
          %160 = sbr.rel (%p158) target = $region20
        $region19: #{tpu_custom_call.1} parent=15 // pred_region
          %s161 = sand.u32 %s61, 1
          %s162 = scalar_lea.sflag [#allocation7], %s161
          %s163 = sand.u32 %s61, 1
          %s164 = smul.addr %s163, 128
          %s165 = scalar_lea.vmem [#allocation6], %s164
          %s166 = sadd.s32 %s31, %s32
          %s167 = sld [smem:[#allocation4 + %s166]]
          %s168 = sadd.s32 %s167, %s33
          %s169 = smul.u32 16, %s168
          %s171 = ssub.s32 2048, 2048
          %172 = vsyncadd %s162, %s171
          %s173 = smul.addr %s31, 16
          %s174 = sadd.s32 %s169, %s173
          %s175 = smul.addr %s174, 128
          %s176 = scalar_lea.hbm %s2, %s175
          %s177 = sshll.u32 %s165, 4
          %s178 = int_to_ptr.vmem [resolvable:$true] %s177
          %183 = dma.hbm_to_vmem [thread:$0]  %s176, 2048, %s178, %s162, 128, 128, 8
        $region20: #{tpu_custom_call.1} parent=15 // pred_fallthru
          _
        // Predicated region
        $region21: #{tpu_custom_call.1} parent=15 // pred_check
          %p184 = pneg %p105
        $region22: #{tpu_custom_call.1} parent=15 // pred_check_branch
          %186 = sbr.rel (%p184) target = $region24
        $region23: #{tpu_custom_call.1} parent=15 // pred_region
          %s187 = sadd.s32 %s31, %s32
          %s188 = sld [smem:[#allocation4 + %s187]]
          %s189 = sadd.s32 %s188, %s33
          %p190 = scmp.lt.s32.totalorder %s31, 1
          %s191 = scalar_select %p190, %s31, 1
          %p192 = scmp.lt.s32.totalorder %s189, 0
          %s193 = scalar_select %p192, %s189, 0
          %s194 = sadd.s32 %s193, %s191
          %s195 = smul.addr %s194, 2
          %s196 = scalar_lea.vmem %s3, %s195
          %s197 = sadd.s32 %s31, %s32
          %s198 = sld [smem:[#allocation4 + %s197]]
          %s199 = sadd.s32 %s198, %s33
        $region24: #{tpu_custom_call.1} parent=15 // pred_fallthru
          _
      $region16: #{tpu_custom_call.1} parent=5 // pred_fallthru
        _
      %p200 = scmp.le.s32.totalorder 1, %s24
      %p201 = scmp.lt.s32.totalorder %s24, 3
      %p202 = pnand %p200, %p201
      %p203 = pneg %p202
      // Predicated region
      $region25: #{tpu_custom_call.1} parent=5 // pred_check
        _
      $region26: #{tpu_custom_call.1} parent=5 // pred_check_branch
        %205 = sbr.rel (%p202) target = $region28
      $region27: #{tpu_custom_call.1} parent=5 // pred_region
        %s206 = ssub.s32 %s24, 1
        %s207 = sand.u32 %s64, 1
        %s208 = scalar_lea.sflag [#allocation7], %s207
        %s209 = sand.u32 %s64, 1
        %s210 = smul.addr %s209, 128
        %s211 = scalar_lea.vmem [#allocation6], %s210
        // Predicated region
        $region29: #{tpu_custom_call.1} parent=27 // pred_check
          %p212 = pneg %p77
        $region30: #{tpu_custom_call.1} parent=27 // pred_check_branch
          %214 = sbr.rel (%p212) target = $region32
        $region31: #{tpu_custom_call.1} parent=27 // pred_region
          %215 = dma.done %s208, 2048
        $region32: #{tpu_custom_call.1} parent=27 // pred_fallthru
          _
        %s216 = sand.u32 %s64, 1
        %s217 = scalar_lea.sflag [#allocation7], %s216
        %s218 = sand.u32 %s64, 1
        %s219 = smul.addr %s218, 128
        %s220 = scalar_lea.vmem [#allocation6], %s219
        %p221 = pneg %p77
        %p222 = pneg %p74
        %s223 = sadd.s32 %s34, %s35
        %s224 = sld [smem:[#allocation4 + %s223]]
        %s225 = sadd.s32 %s224, %s36
        %p226 = scmp.lt.s32.totalorder %s34, 1
        %s227 = scalar_select %p226, %s34, 1
        %p228 = scmp.lt.s32.totalorder %s225, 0
        %s229 = scalar_select %p228, %s225, 0
        %s230 = sadd.s32 %s229, %s227
        %s231 = smul.addr %s230, 2
        %s232 = scalar_lea.vmem %s3, %s231
        %p233 = pneg %p111
        %p234 = pneg %p108
        %p235 = pneg %p139
        %p236 = pneg %p136
        %s237 = sand.u32 %s126, 1
        %s238 = scalar_lea.sflag [#allocation8], %s237
        %s239 = sand.u32 %s126, 1
        %s240 = smul.addr %s239, 16
        %s241 = scalar_lea.vmem [#allocation9], %s240
        %s242 = sadd.s32 %s34, %s35
        %s243 = sld [smem:[#allocation4 + %s242]]
        %s244 = sadd.s32 %s243, %s36
        %s245 = smul.u32 16, %s244
        %s246 = sadd.s32 %s34, %s35
        %s247 = sld [smem:[#allocation4 + %s246]]
        %s248 = sadd.s32 %s247, %s36
        %p249 = scmp.lt.s32.totalorder %s34, 1
        %s250 = scalar_select %p249, %s34, 1
        %p251 = scmp.lt.s32.totalorder %s248, 0
        %s252 = scalar_select %p251, %s248, 0
        %s253 = sadd.s32 %s252, %s250
        %s254 = smul.addr %s253, 2
        %s255 = scalar_lea.vmem %s3, %s254
        %s256 = sadd.s32 %s34, %s35
        %s257 = sld [smem:[#allocation4 + %s256]]
        %s258 = sadd.s32 %s257, %s36
        %s259 = smul.u32 2, %s35
        %p260 = scmp.eq.s32.totalorder %s36, 0
        %s261 = smul.u32 %s35, 16
        %s262 = sld [smem:[#allocation5 + %s34]]
        %s263 = ssub.s32 %s262, %s261
        %p264 = scmp.gt.s32.totalorder %s263, 0
        // Predicated region
        $region33: #{tpu_custom_call.1} parent=27 // pred_check
          %p265 = pneg %p264
        $region34: #{tpu_custom_call.1} parent=27 // pred_check_branch
          %267 = sbr.rel (%p265) target = $region36
        $region35: #{tpu_custom_call.1} parent=27 // pred_region
          // Predicated region
          $region37: #{tpu_custom_call.1} parent=35 // pred_check
            %p268 = pneg %p260
          $region38: #{tpu_custom_call.1} parent=35 // pred_check_branch
            %270 = sbr.rel (%p268) target = $region40
          $region39: #{tpu_custom_call.1} parent=35 // pred_region
            %271 = vst [vmem:[#allocation2] sm:$0xff] 0.0
            %272 = vst [vmem:[#allocation2 + $0x8] sm:$0xff] 0.0
          $region40: #{tpu_custom_call.1} parent=35 // pred_fallthru
            _
          %v273 = vld [vmem:[%s255] sm:$0x3]
          %v274 = vstv %s261
          %v275 = vsub.s32 %v273, %v274
          %v276 = vlaneseq
          %v277 = vshrl.u32 %v276, 7
          %v278 = vadd.s32 %v277, 8
          %v279 = vlaneseq
          %v280 = vshrl.u32 %v279, 7
          %v281 = vsub.s32 0, %v280
          %v282 = vrot.slane %v275, %v281
          %vm283 = vcmp.ge.s32.totalorder %v277, %v282
          %vm284 = vcmp.ge.s32.totalorder %v278, %v282
          %v285 = vlaneseq
          %v286 = vshrl.u32 %v285, 7
          %v287 = vsub.s32 1, %v286
          %v288 = vrot.slane %v275, %v287
          %vm289 = vcmp.lt.s32.totalorder %v277, %v288
          %vm290 = vcmp.lt.s32.totalorder %v278, %v288
          %vm291 = vmand %vm283, %vm289
          %vm292 = vmand %vm284, %vm290
          %v293 = vld [vmem:[#allocation2] sm:$0xff]
          %v294 = vld [vmem:[#allocation2 + $0x8] sm:$0xff]
          %v295 = vsel %vm291, 1, 0
          %v296 = vsel %vm292, 1, 0
          %v297 = vcvt.s32.f32 %v295
          %v298 = vcvt.s32.f32 %v296
          %v299 = vld [vmem:[%s211] sm:$0xff]
          %v300 = vld [vmem:[%s211 + $0x8] sm:$0xff]
          %v301 = vld [vmem:[%s211 + $0x10] sm:$0xff]
          %v302 = vld [vmem:[%s211 + $0x18] sm:$0xff]
          %v303 = vld [vmem:[%s211 + $0x20] sm:$0xff]
          %v304 = vld [vmem:[%s211 + $0x28] sm:$0xff]
          %v305 = vld [vmem:[%s211 + $0x30] sm:$0xff]
          %v306 = vld [vmem:[%s211 + $0x38] sm:$0xff]
          %v307 = vld [vmem:[%s211 + $0x40] sm:$0xff]
          %v308 = vld [vmem:[%s211 + $0x48] sm:$0xff]
          %v309 = vld [vmem:[%s211 + $0x50] sm:$0xff]
          %v310 = vld [vmem:[%s211 + $0x58] sm:$0xff]
          %v311 = vld [vmem:[%s211 + $0x60] sm:$0xff]
          %v312 = vld [vmem:[%s211 + $0x68] sm:$0xff]
          %v313 = vld [vmem:[%s211 + $0x70] sm:$0xff]
          %v314 = vld [vmem:[%s211 + $0x78] sm:$0xff]
          %315 = vmatprep.subr.mxu0 0.0
          %316 = vmatpush1.msra.mxu0 %v314
          %317 = vmatprep.subr.mxu0 0.0
          %318 = vmatpush1.msra.mxu0 %v313
          %319 = vmatprep.subr.mxu0 0.0
          %320 = vmatpush1.msra.mxu0 %v312
          %321 = vmatprep.subr.mxu0 0.0
          %322 = vmatpush1.msra.mxu0 %v311
          %323 = vmatprep.subr.mxu0 0.0
          %324 = vmatpush1.msra.mxu0 %v310
          %325 = vmatprep.subr.mxu0 0.0
          %326 = vmatpush1.msra.mxu0 %v309
          %327 = vmatprep.subr.mxu0 0.0
          %328 = vmatpush1.msra.mxu0 %v308
          %329 = vmatprep.subr.mxu0 0.0
          %330 = vmatpush1.msra.mxu0 %v307
          %331 = vmatprep.subr.mxu0 0.0
          %332 = vmatpush1.msra.mxu0 %v306
          %333 = vmatprep.subr.mxu0 0.0
          %334 = vmatpush1.msra.mxu0 %v305
          %335 = vmatprep.subr.mxu0 0.0
          %336 = vmatpush1.msra.mxu0 %v304
          %337 = vmatprep.subr.mxu0 0.0
          %338 = vmatpush1.msra.mxu0 %v303
          %339 = vmatprep.subr.mxu0 0.0
          %340 = vmatpush1.msra.mxu0 %v302
          %341 = vmatprep.subr.mxu0 0.0
          %342 = vmatpush1.msra.mxu0 %v301
          %343 = vmatprep.subr.mxu0 0.0
          %344 = vmatpush1.msra.mxu0 %v300
          %345 = vmatprep.subr.mxu0 0.0
          %346 = vmatpush1.msra.mxu0 %v299
          %347 = vmatprep.subr.mxu0 0.0
          %348 = vmatpush2.msra.mxu0 0.0
          %349 = vmatprep.subr.mxu0 0.0
          %350 = vmatpush2.msra.mxu0 0.0
          %351 = vmatprep.subr.mxu0 0.0
          %352 = vmatpush2.msra.mxu0 0.0
          %353 = vmatprep.subr.mxu0 0.0
          %354 = vmatpush2.msra.mxu0 0.0
          %355 = vmatprep.subr.mxu0 0.0
          %356 = vmatpush2.msra.mxu0 0.0
          %357 = vmatprep.subr.mxu0 0.0
          %358 = vmatpush2.msra.mxu0 0.0
          %359 = vmatprep.subr.mxu0 0.0
          %360 = vmatpush2.msra.mxu0 0.0
          %361 = vmatprep.subr.mxu0 0.0
          %362 = vmatpush2.msra.mxu0 0.0
          %363 = vmatprep.subr.mxu0 0.0
          %364 = vmatpush2.msra.mxu0 0.0
          %365 = vmatprep.subr.mxu0 0.0
          %366 = vmatpush2.msra.mxu0 0.0
          %367 = vmatprep.subr.mxu0 0.0
          %368 = vmatpush2.msra.mxu0 0.0
          %369 = vmatprep.subr.mxu0 0.0
          %370 = vmatpush2.msra.mxu0 0.0
          %371 = vmatprep.subr.mxu0 0.0
          %372 = vmatpush2.msra.mxu0 0.0
          %373 = vmatprep.subr.mxu0 0.0
          %374 = vmatpush2.msra.mxu0 0.0
          %375 = vmatprep.subr.mxu0 0.0
          %376 = vmatpush2.msra.mxu0 0.0
          %377 = vmatprep.subr.mxu0 0.0
          %378 = vmatpush2.msra.mxu0 0.0
          %379 = vmatprep.mubr.f32.mxu0 0.0
          %380 = vmatmul.mubr.f32.gmra.mxu0 %v297
          %v381 = vpop.f32.mrf.mxu0
          %v382 = vadd.f32 0.0, %v381
          %v383 = vpop.f32.mrf.mxu0
          %384 = vmatprep.mubr.f32.mxu0 0.0
          %385 = vmatmul.mubr.f32.gmra.mxu0 %v298
          %v386 = vpop.f32.mrf.mxu0
          %v387 = vadd.f32 0.0, %v386
          %v388 = vpop.f32.mrf.mxu0
          %389 = vdwg.mxu0
          %v390 = vadd.f32 %v293, %v382
          %v391 = vadd.f32 %v294, %v387
          %392 = vst [vmem:[#allocation2] sm:$0xff] %v390
          %393 = vst [vmem:[#allocation2 + $0x8] sm:$0xff] %v391
        $region36: #{tpu_custom_call.1} parent=27 // pred_fallthru
          _
        // Predicated region
        $region41: #{tpu_custom_call.1} parent=27 // pred_check
          %p394 = pneg %p260
        $region42: #{tpu_custom_call.1} parent=27 // pred_check_branch
          %396 = sbr.rel (%p394) target = $region44
        $region43: #{tpu_custom_call.1} parent=27 // pred_region
          // Predicated region
          $region45: #{tpu_custom_call.1} parent=43 // pred_check
            %p397 = pneg %p264
          $region46: #{tpu_custom_call.1} parent=43 // pred_check_branch
            %399 = sbr.rel (%p397) target = $region48
          $region47: #{tpu_custom_call.1} parent=43 // pred_region
            %v400 = vld [vmem:[#allocation2] sm:$0xff]
            %v401 = vld [vmem:[#allocation2 + $0x8] sm:$0xff]
            %402 = vst [vmem:[%s241] sm:$0xff] %v400
            %403 = vst [vmem:[%s241 + $0x8] sm:$0xff] %v401
          $region48: #{tpu_custom_call.1} parent=43 // pred_fallthru
            _
          %p404 = scmp.le.s32.totalorder %s263, 0
          // Predicated region
          $region49: #{tpu_custom_call.1} parent=43 // pred_check
            %p405 = pneg %p404
          $region50: #{tpu_custom_call.1} parent=43 // pred_check_branch
            %407 = sbr.rel (%p405) target = $region52
          $region51: #{tpu_custom_call.1} parent=43 // pred_region
            %408 = vst [vmem:[%s241] sm:$0xff] 0.0
            %409 = vst [vmem:[%s241 + $0x8] sm:$0xff] 0.0
          $region52: #{tpu_custom_call.1} parent=43 // pred_fallthru
            _
        $region44: #{tpu_custom_call.1} parent=27 // pred_fallthru
          _
        %s410 = sand.u32 %s126, 1
        %s411 = scalar_lea.sflag [#allocation8], %s410
        %s412 = sand.u32 %s126, 1
        %s413 = smul.addr %s412, 16
        %s414 = scalar_lea.vmem [#allocation9], %s413
        // Predicated region
        $region53: #{tpu_custom_call.1} parent=27 // pred_check
          %p415 = pneg %p136
        $region54: #{tpu_custom_call.1} parent=27 // pred_check_branch
          %417 = sbr.rel (%p415) target = $region56
        $region55: #{tpu_custom_call.1} parent=27 // pred_region
          %s418 = smul.u32 2, %s35
          %s420 = ssub.s32 256, 256
          %421 = vsyncadd %s411, %s420
          %s422 = smul.addr %s34, 2
          %s423 = sadd.s32 %s418, %s422
          %s424 = smul.addr %s423, 128
          %s425 = scalar_lea.hbm %s4, %s424
          %s426 = sshll.u32 %s414, 4
          %s427 = int_to_ptr.vmem [resolvable:$true] %s426
          %432 = dma.vmem_to_hbm [thread:$0]  %s427, 256, %s425, %s411, 128, 128, 8
        $region56: #{tpu_custom_call.1} parent=27 // pred_fallthru
          _
      $region28: #{tpu_custom_call.1} parent=5 // pred_fallthru
        _
      %p433 = scmp.le.s32.totalorder 2, %s24
      // Predicated region
      $region57: #{tpu_custom_call.1} parent=5 // pred_check
        %p434 = pneg %p433
      $region58: #{tpu_custom_call.1} parent=5 // pred_check_branch
        %436 = sbr.rel (%p434) target = $region60
      $region59: #{tpu_custom_call.1} parent=5 // pred_region
        %s437 = ssub.s32 %s24, 2
        // Predicated region
        $region61: #{tpu_custom_call.1} parent=59 // pred_check
          %p438 = pneg %p142
        $region62: #{tpu_custom_call.1} parent=59 // pred_check_branch
          %440 = sbr.rel (%p438) target = $region64
        $region63: #{tpu_custom_call.1} parent=59 // pred_region
          %s441 = sand.u32 %s127, 1
          %s442 = scalar_lea.sflag [#allocation8], %s441
          %s443 = sand.u32 %s127, 1
          %s444 = smul.addr %s443, 16
          %s445 = scalar_lea.vmem [#allocation9], %s444
          %446 = dma.done %s442, 256
        $region64: #{tpu_custom_call.1} parent=59 // pred_fallthru
          _
      $region60: #{tpu_custom_call.1} parent=5 // pred_fallthru
        _
    $region6: #{tpu_custom_call.1} parent=1 // loop_footer
      %s28 = sadd.s32 1, %s24
    $region7: #{tpu_custom_call.1} parent=1 // loop_footer_branch
      %23 = sbr.rel target = $region3
    $region8: #{tpu_custom_call.1} parent=1 // loop_exit
      _
    %447 = vsyncpa [#allocation7], 1
    %s448 = scalar_lea.sflag [#allocation7], 1
    %449 = vsyncpa %s448, 1
    %450 = vsyncpa [#allocation8], 1
    %s451 = scalar_lea.sflag [#allocation8], 1
    %452 = vsyncpa %s451, 1

</llo_original>
